<compile_context>
chip_gen: v5e
topology: v5e:2x2
jax: 0.10.0
libtpu: 0.0.40
codegen_flags: <defaults>
</compile_context>

<pallas_src>
import numpy as np
import jax
import jax.numpy as jnp
from jax.experimental import pallas as pl
from jax.experimental.pallas import tpu as pltpu


LANE = 128       # TPU lane width (last-dim alignment)
SUBLANE = 8      # f32 sublane count (second-to-last-dim alignment)
NEG_INF = -1e30  # finite "-inf" bias for padded logit columns


def _round_up(x, m):
    return ((x + m - 1) // m) * m


def bow_ffnn_kernel(counts_ref, inv_lens_ref, emb_ref,
                    w1_ref, b1_ref, w2_ref, b2_ref,
                    out_ref, acc_ref):
    """One (batch-tile i, vocab-tile k) grid step.

    counts_ref : (TB, TV)  bf16   streamed
    inv_lens_ref: (TB, 1)  f32    streamed (tiny)
    emb_ref    : (TV, Dp)  bf16   streamed per vocab tile
    w1/b1/w2/b2: resident f32 weights (block index constant across the grid)
    out_ref    : (TB, Op)  f32    written at the last vocab tile
    acc_ref    : (TB, Dp)  f32    VMEM scratch accumulator
    """
    k = pl.program_id(1)

    @pl.when(k == 0)
    def _init():
        acc_ref[...] = jnp.zeros_like(acc_ref)

    # EmbeddingBag partial sum for this vocab tile (bf16 x bf16 -> f32 on MXU).
    acc_ref[...] += jnp.dot(counts_ref[...], emb_ref[...],
                            preferred_element_type=jnp.float32)

    @pl.when(k == pl.num_programs(1) - 1)
    def _finalize():
        # mode='mean': multiply by host-precomputed 1/len (no in-kernel divide).
        vec = acc_ref[...] * inv_lens_ref[...]                     # (TB, Dp) f32

        # FFNN: Linear -> ReLU -> Linear (weights VMEM-resident, f32).
        h = jnp.dot(vec, w1_ref[...],
                    preferred_element_type=jnp.float32) + b1_ref[...]
        h = jnp.maximum(h, 0.0)
        logits = jnp.dot(h, w2_ref[...],
                         preferred_element_type=jnp.float32) + b2_ref[...]
        # Padded output columns carry a -1e30 bias -> they vanish in softmax.

        # LogSoftmax(dim=1) over the lane-dense (TB, Op) block.
        m = jnp.max(logits, axis=1, keepdims=True)
        shifted = logits - m
        lse = jnp.log(jnp.sum(jnp.exp(shifted), axis=1, keepdims=True))
        out_ref[...] = shifted - lse


def bow_ffnn_forward(counts, inv_lens, emb, w1, b1, w2, b2, *, tb=SUBLANE, tv=LANE):
    """All operands pre-padded: counts (Bp,Vp) bf16, inv_lens (Bp,1) f32,
    emb (Vp,Dp) bf16, w1 (Dp,Hp), b1 (1,Hp), w2 (Hp,Op), b2 (1,Op) f32.
    Returns padded (Bp, Op) f32 log-probabilities."""
    B_pad, V_pad = counts.shape
    D_pad = emb.shape[1]
    H_pad = w1.shape[1]
    O_pad = w2.shape[1]
    grid = (B_pad // tb, V_pad // tv)

    grid_spec = pltpu.PrefetchScalarGridSpec(
        num_scalar_prefetch=0,
        grid=grid,
        in_specs=[
            # Streamed tiles (double-buffered by Pallas). If the counts DMA is
            # still exposed at scale, raise depth: pipeline_mode=pl.Buffered(3).
            pl.BlockSpec((tb, tv), lambda i, k: (i, k)),         # counts
            pl.BlockSpec((tb, 1), lambda i, k: (i, 0)),          # inv_lens
            pl.BlockSpec((tv, D_pad), lambda i, k: (k, 0)),      # emb vocab tile
            # Resident weights: block index never changes -> loaded once.
            pl.BlockSpec((D_pad, H_pad), lambda i, k: (0, 0)),   # w1
            pl.BlockSpec((1, H_pad), lambda i, k: (0, 0)),       # b1
            pl.BlockSpec((H_pad, O_pad), lambda i, k: (0, 0)),   # w2
            pl.BlockSpec((1, O_pad), lambda i, k: (0, 0)),       # b2
        ],
        out_specs=pl.BlockSpec((tb, O_pad), lambda i, k: (i, 0)),
        scratch_shapes=[pltpu.VMEM((tb, D_pad), jnp.float32)],
    )
    return pl.pallas_call(
        bow_ffnn_kernel,
        out_shape=jax.ShapeDtypeStruct((B_pad, O_pad), jnp.float32),
        grid_spec=grid_spec,
        compiler_params=pltpu.CompilerParams(
            dimension_semantics=("parallel", "arbitrary"),
            # Explicit budget with headroom; fits v7x's 64 MiB VMEM.
            vmem_limit_bytes=64 * 1024 * 1024,
        ),
    )(counts, inv_lens, emb, w1, b1, w2, b2)


def bow_ffnn_random_apply(input_bags, params, *, tb=SUBLANE, tv=LANE):
    """Host-side glue (the Python batch/offsets loop of forward()) + padding,
    then one pallas_call; returns (B, output_size) log-probabilities."""
    emb, w1, b1, w2, b2 = params
    V, D = emb.shape
    H = w1.shape[1]
    O = w2.shape[1]
    B = len(input_bags)

    V_pad = _round_up(V, tv)
    B_pad = _round_up(max(B, 1), tb)
    D_pad = _round_up(D, LANE)
    H_pad = _round_up(H, LANE)
    O_pad = _round_up(O, LANE)

    # Variable-length bags of token ids -> dense per-bag count matrix + 1/len.
    counts = np.zeros((B_pad, V_pad), dtype=np.float32)
    inv_lens = np.ones((B_pad, 1), dtype=np.float32)
    for i, bag in enumerate(input_bags):
        for tok in bag:
            counts[i, int(tok)] += 1.0
        inv_lens[i, 0] = 1.0 / max(len(bag), 1)   # empty bag -> all-zero mean

    # Zero-pad weights to lane-aligned shapes (exact: zero rows/cols are inert).
    emb_p = np.zeros((V_pad, D_pad), np.float32); emb_p[:V, :D] = np.asarray(emb)
    w1_p = np.zeros((D_pad, H_pad), np.float32); w1_p[:D, :H] = np.asarray(w1)
    b1_p = np.zeros((1, H_pad), np.float32);     b1_p[:, :H] = np.asarray(b1)
    w2_p = np.zeros((H_pad, O_pad), np.float32); w2_p[:H, :O] = np.asarray(w2)
    b2_p = np.full((1, O_pad), NEG_INF, np.float32); b2_p[:, :O] = np.asarray(b2)

    out_pad = bow_ffnn_forward(
        jnp.asarray(counts, jnp.bfloat16),     # small integer counts: exact bf16
        jnp.asarray(inv_lens, jnp.float32),
        jnp.asarray(emb_p, jnp.bfloat16),      # dominant HBM operand -> bf16
        jnp.asarray(w1_p), jnp.asarray(b1_p),
        jnp.asarray(w2_p), jnp.asarray(b2_p),
        tb=tb, tv=tv)
    return out_pad[:B, :O]


def init_params(key, voca_size, input_size, hidden_size, output_size):
    k_emb, k_w1, k_b1, k_w2, k_b2 = jax.random.split(key, 5)
    # nn.EmbeddingBag default init: N(0, 1)
    emb = jax.random.normal(k_emb, (voca_size, input_size), dtype=jnp.float32)
    # nn.Linear default init: U(-1/sqrt(fan_in), 1/sqrt(fan_in))
    bnd1 = 1.0 / np.sqrt(input_size)
    w1 = jax.random.uniform(k_w1, (input_size, hidden_size),
                            minval=-bnd1, maxval=bnd1, dtype=jnp.float32)
    b1 = jax.random.uniform(k_b1, (1, hidden_size),
                            minval=-bnd1, maxval=bnd1, dtype=jnp.float32)
    bnd2 = 1.0 / np.sqrt(hidden_size)
    w2 = jax.random.uniform(k_w2, (hidden_size, output_size),
                            minval=-bnd2, maxval=bnd2, dtype=jnp.float32)
    b2 = jax.random.uniform(k_b2, (1, output_size),
                            minval=-bnd2, maxval=bnd2, dtype=jnp.float32)
    return emb, w1, b1, w2, b2


if __name__ == "__main__":
    # Small but non-trivial shapes: exercises 3 batch tiles x 3 vocab tiles.
    voca_size, input_size, hidden_size, output_size = 300, 16, 32, 5
    B = 20

    key = jax.random.PRNGKey(0)
    k_params, k_tok = jax.random.split(key)
    params = init_params(k_params, voca_size, input_size, hidden_size, output_size)
    emb, w1, b1, w2, b2 = params

    # Deterministic variable-length bags of token ids (the module's `input`).
    bag_lens = [(i % 9) + 1 for i in range(B)]
    all_toks = jax.random.randint(k_tok, (sum(bag_lens),), 0, voca_size)
    all_toks = np.asarray(all_toks)
    input_bags, off = [], 0
    for n in bag_lens:
        input_bags.append(list(all_toks[off:off + n]))
        off += n

    out = bow_ffnn_random_apply(input_bags, params)
    out = jax.block_until_ready(out)

    # Pure-JAX/numpy reference (using the same bf16-rounded embedding table
    # and the same f32 1/len values the kernel consumes).
    counts_np = np.zeros((B, voca_size), dtype=np.float32)
    inv_np = np.ones((B, 1), dtype=np.float32)
    for i, bag in enumerate(input_bags):
        for tok in bag:
            counts_np[i, int(tok)] += 1.0
        inv_np[i, 0] = 1.0 / max(len(bag), 1)
    emb_bf = np.asarray(jnp.asarray(emb, jnp.bfloat16).astype(jnp.float32))
    vec_ref = (counts_np @ emb_bf) * inv_np
    h_ref = np.maximum(vec_ref @ np.asarray(w1) + np.asarray(b1), 0.0)
    logits_ref = h_ref @ np.asarray(w2) + np.asarray(b2)
    ref = np.asarray(jax.nn.log_softmax(jnp.asarray(logits_ref), axis=1))

    np.testing.assert_allclose(np.asarray(out), ref, rtol=5e-3, atol=5e-3)
    print("KERNEL_OK")
</pallas_src>

<mosaic_0001>
module attributes {stable_mosaic.version = 11 : i64} {
  func.func @bow_ffnn_kernel(%arg0: i32, %arg1: i32, %arg2: memref<8x128xbf16, #tpu.memory_space<vmem>>, %arg3: memref<8x1xf32, #tpu.memory_space<vmem>>, %arg4: memref<128x128xbf16, #tpu.memory_space<vmem>>, %arg5: memref<128x128xf32, #tpu.memory_space<vmem>>, %arg6: memref<1x128xf32, #tpu.memory_space<vmem>>, %arg7: memref<128x128xf32, #tpu.memory_space<vmem>>, %arg8: memref<1x128xf32, #tpu.memory_space<vmem>>, %arg9: memref<8x128xf32, #tpu.memory_space<vmem>>, %arg10: memref<8x128xf32, #tpu.memory_space<vmem>>) attributes {dimension_semantics = [#tpu.dimension_semantics<parallel>, #tpu.dimension_semantics<arbitrary>], iteration_bounds = array<i64: 3, 3>, scalar_prefetch = 0 : i64, scratch_operands = 1 : i64, tpu.core_type = #tpu.core_type<tc>, window_params = [{transform_indices = @transform_0, window_bounds = array<i64: 8, 128>}, {transform_indices = @transform_1, window_bounds = array<i64: 8, 1>}, {transform_indices = @transform_2, window_bounds = array<i64: 128, 128>}, {pipeline_mode = #tpu.pipeline_mode<synchronous>, transform_indices = @transform_3, window_bounds = array<i64: 128, 128>}, {pipeline_mode = #tpu.pipeline_mode<synchronous>, transform_indices = @transform_4, window_bounds = array<i64: 1, 128>}, {pipeline_mode = #tpu.pipeline_mode<synchronous>, transform_indices = @transform_5, window_bounds = array<i64: 128, 128>}, {pipeline_mode = #tpu.pipeline_mode<synchronous>, transform_indices = @transform_6, window_bounds = array<i64: 1, 128>}, {transform_indices = @transform_7, window_bounds = array<i64: 8, 128>}]} {
    %c0_i32 = arith.constant 0 : i32
    %0 = arith.cmpi eq, %arg1, %c0_i32 : i32
    %1 = arith.extui %0 : i1 to i32
    %c0_i32_0 = arith.constant 0 : i32
    %2 = arith.cmpi ne, %1, %c0_i32_0 : i32
    scf.if %2 {
      %cst_9 = arith.constant 0.000000e+00 : f32
      %12 = vector.broadcast %cst_9 : f32 to vector<8x128xf32>
      %c0_10 = arith.constant 0 : index
      %c0_11 = arith.constant 0 : index
      %13 = vector.load %arg10[%c0_10, %c0_11] : memref<8x128xf32, #tpu.memory_space<vmem>>, vector<8x128xf32>
      tpu.vector_store %arg10[%c0_10, %c0_11], %12 {strides = array<i32>} : memref<8x128xf32, #tpu.memory_space<vmem>>, vector<8x128xf32>,
    } else {
    }
    %c0 = arith.constant 0 : index
    %c0_1 = arith.constant 0 : index
    %3 = vector.load %arg10[%c0, %c0_1] : memref<8x128xf32, #tpu.memory_space<vmem>>, vector<8x128xf32>
    %c0_2 = arith.constant 0 : index
    %c0_3 = arith.constant 0 : index
    %4 = vector.load %arg2[%c0_2, %c0_3] : memref<8x128xbf16, #tpu.memory_space<vmem>>, vector<8x128xbf16>
    %c0_4 = arith.constant 0 : index
    %c0_5 = arith.constant 0 : index
    %5 = vector.load %arg4[%c0_4, %c0_5] : memref<128x128xbf16, #tpu.memory_space<vmem>>, vector<128x128xbf16>
    %cst = arith.constant dense<0.000000e+00> : vector<8x128xf32>
    %6 = tpu.matmul %4, %5, %cst {dimension_numbers = #tpu.dot_dimension_numbers<[1], [0], [0], [1], [0, 0, 1, 1], [], []>} : vector<8x128xbf16>, vector<128x128xbf16>, vector<8x128xf32> -> vector<8x128xf32>
    %7 = arith.addf %3, %6 : vector<8x128xf32>
    %c0_6 = arith.constant 0 : index
    %c0_7 = arith.constant 0 : index
    %8 = vector.load %arg10[%c0_6, %c0_7] : memref<8x128xf32, #tpu.memory_space<vmem>>, vector<8x128xf32>
    tpu.vector_store %arg10[%c0_6, %c0_7], %7 {strides = array<i32>} : memref<8x128xf32, #tpu.memory_space<vmem>>, vector<8x128xf32>,
    %c2_i32 = arith.constant 2 : i32
    %9 = arith.cmpi eq, %arg1, %c2_i32 : i32
    %10 = arith.extui %9 : i1 to i32
    %c0_i32_8 = arith.constant 0 : i32
    %11 = arith.cmpi ne, %10, %c0_i32_8 : i32
    scf.if %11 {
      %c0_9 = arith.constant 0 : index
      %c0_10 = arith.constant 0 : index
      %12 = vector.load %arg10[%c0_9, %c0_10] : memref<8x128xf32, #tpu.memory_space<vmem>>, vector<8x128xf32>
      %c0_11 = arith.constant 0 : index
      %c0_12 = arith.constant 0 : index
      %13 = vector.load %arg3[%c0_11, %c0_12] : memref<8x1xf32, #tpu.memory_space<vmem>>, vector<8x1xf32>
      %14 = vector.broadcast %13 : vector<8x1xf32> to vector<8x128xf32>
      %15 = arith.mulf %12, %14 : vector<8x128xf32>
      %c0_13 = arith.constant 0 : index
      %c0_14 = arith.constant 0 : index
      %16 = vector.load %arg5[%c0_13, %c0_14] : memref<128x128xf32, #tpu.memory_space<vmem>>, vector<128x128xf32>
      %cst_15 = arith.constant dense<0.000000e+00> : vector<8x128xf32>
      %17 = tpu.matmul %15, %16, %cst_15 {dimension_numbers = #tpu.dot_dimension_numbers<[1], [0], [0], [1], [0, 0, 1, 1], [], []>} : vector<8x128xf32>, vector<128x128xf32>, vector<8x128xf32> -> vector<8x128xf32>
      %c0_16 = arith.constant 0 : index
      %c0_17 = arith.constant 0 : index
      %18 = vector.load %arg6[%c0_16, %c0_17] : memref<1x128xf32, #tpu.memory_space<vmem>>, vector<1x128xf32>
      %19 = vector.broadcast %18 : vector<1x128xf32> to vector<8x128xf32>
      %20 = arith.addf %17, %19 : vector<8x128xf32>
      %cst_18 = arith.constant 0.000000e+00 : f32
      %21 = vector.broadcast %cst_18 : f32 to vector<8x128xf32>
      %22 = arith.maximumf %20, %21 : vector<8x128xf32>
      %c0_19 = arith.constant 0 : index
      %c0_20 = arith.constant 0 : index
      %23 = vector.load %arg7[%c0_19, %c0_20] : memref<128x128xf32, #tpu.memory_space<vmem>>, vector<128x128xf32>
      %cst_21 = arith.constant dense<0.000000e+00> : vector<8x128xf32>
      %24 = tpu.matmul %22, %23, %cst_21 {dimension_numbers = #tpu.dot_dimension_numbers<[1], [0], [0], [1], [0, 0, 1, 1], [], []>} : vector<8x128xf32>, vector<128x128xf32>, vector<8x128xf32> -> vector<8x128xf32>
      %c0_22 = arith.constant 0 : index
      %c0_23 = arith.constant 0 : index
      %25 = vector.load %arg8[%c0_22, %c0_23] : memref<1x128xf32, #tpu.memory_space<vmem>>, vector<1x128xf32>
      %26 = vector.broadcast %25 : vector<1x128xf32> to vector<8x128xf32>
      %27 = arith.addf %24, %26 : vector<8x128xf32>
      %cst_24 = arith.constant dense<0xFF800000> : vector<8xf32>
      %28 = vector.multi_reduction <maximumf>, %27, %cst_24 [1] : vector<8x128xf32> to vector<8xf32>
      %29 = vector.shape_cast %28 : vector<8xf32> to vector<8x1xf32>
      %30 = vector.broadcast %29 : vector<8x1xf32> to vector<8x128xf32>
      %31 = arith.subf %27, %30 : vector<8x128xf32>
      %32 = math.exp %31 : vector<8x128xf32>
      %cst_25 = arith.constant dense<0.000000e+00> : vector<8xf32>
      %33 = vector.multi_reduction <add>, %32, %cst_25 [1] : vector<8x128xf32> to vector<8xf32>
      %34 = vector.shape_cast %33 : vector<8xf32> to vector<8x1xf32>
      %35 = math.log %34 : vector<8x1xf32>
      %36 = vector.broadcast %35 : vector<8x1xf32> to vector<8x128xf32>
      %37 = arith.subf %31, %36 : vector<8x128xf32>
      %c0_26 = arith.constant 0 : index
      %c0_27 = arith.constant 0 : index
      %38 = vector.load %arg9[%c0_26, %c0_27] : memref<8x128xf32, #tpu.memory_space<vmem>>, vector<8x128xf32>
      tpu.vector_store %arg9[%c0_26, %c0_27], %37 {strides = array<i32>} : memref<8x128xf32, #tpu.memory_space<vmem>>, vector<8x128xf32>,
    } else {
    }
    return
  }
  func.func @transform_0(%arg0: i32, %arg1: i32) -> (i32, i32) {
    %c0_i32 = arith.constant 0 : i32
    return %arg0, %arg1 : i32, i32
  }
  func.func @transform_1(%arg0: i32, %arg1: i32) -> (i32, i32) {
    %c0_i32 = arith.constant 0 : i32
    %c0_i32_0 = arith.constant 0 : i32
    return %arg0, %c0_i32 : i32, i32
  }
  func.func @transform_2(%arg0: i32, %arg1: i32) -> (i32, i32) {
    %c0_i32 = arith.constant 0 : i32
    %c0_i32_0 = arith.constant 0 : i32
    return %arg1, %c0_i32 : i32, i32
  }
  func.func @transform_3(%arg0: i32, %arg1: i32) -> (i32, i32) {
    %c0_i32 = arith.constant 0 : i32
    %c0_i32_0 = arith.constant 0 : i32
    %c0_i32_1 = arith.constant 0 : i32
    return %c0_i32, %c0_i32_0 : i32, i32
  }
  func.func @transform_4(%arg0: i32, %arg1: i32) -> (i32, i32) {
    %c0_i32 = arith.constant 0 : i32
    %c0_i32_0 = arith.constant 0 : i32
    %c0_i32_1 = arith.constant 0 : i32
    return %c0_i32, %c0_i32_0 : i32, i32
  }
  func.func @transform_5(%arg0: i32, %arg1: i32) -> (i32, i32) {
    %c0_i32 = arith.constant 0 : i32
    %c0_i32_0 = arith.constant 0 : i32
    %c0_i32_1 = arith.constant 0 : i32
    return %c0_i32, %c0_i32_0 : i32, i32
  }
  func.func @transform_6(%arg0: i32, %arg1: i32) -> (i32, i32) {
    %c0_i32 = arith.constant 0 : i32
    %c0_i32_0 = arith.constant 0 : i32
    %c0_i32_1 = arith.constant 0 : i32
    return %c0_i32, %c0_i32_0 : i32, i32
  }
  func.func @transform_7(%arg0: i32, %arg1: i32) -> (i32, i32) {
    %c0_i32 = arith.constant 0 : i32
    %c0_i32_0 = arith.constant 0 : i32
    return %arg0, %c0_i32 : i32, i32
  }
}

</mosaic_0001>

<llo_original>
// kernel: tpu_custom_call.1
$region0: #{tpu_custom_call.1}
  #allocation0 [shape = 'u32[]', space=smem, size = 0x4, offset = 0x4, fixed_abs, tag = 'smem constant byte address 0x4 - core index']
  #allocation1 [shape = 'u32[72,128]{1,0:T(1,128)}', space=vmem, size = 0x9000, scoped, tag = 'internal scratch']
  #allocation2 [shape = 'f32[8,128]{1,0:T(8,128)}', space=vmem, size = 0x1000, scoped, tag = 'scratch operand']
  %s0 = inlined_call_operand.hbm [shape: bf16[24,384], index: 0, kind: input, shape index: {}]
  %s1 = inlined_call_operand.vmem [shape: f32[24,1], index: 1, kind: input, shape index: {}]
  %s2 = inlined_call_operand.hbm [shape: bf16[384,128], index: 2, kind: input, shape index: {}]
  %s3 = inlined_call_operand.hbm [shape: f32[128,128], index: 3, kind: input, shape index: {}]
  %s4 = inlined_call_operand.vmem [shape: f32[1,128], index: 4, kind: input, shape index: {}]
  %s5 = inlined_call_operand.hbm [shape: f32[128,128], index: 5, kind: input, shape index: {}]
  %s6 = inlined_call_operand.vmem [shape: f32[1,128], index: 6, kind: input, shape index: {}]
  %s7 = inlined_call_operand.hbm [shape: f32[24,128], index: 7, kind: output, shape index: {}]
  %s8 = sld [smem:[#allocation0]]
  $region85: #{tpu_custom_call.1} parent=0
    _
  %s10 = ssub.s32 1, %s8
  %s11 = scalar_select 0, %s10, %s8
  $region1: #{tpu_custom_call.1} parent=0
    #allocation3 [shape = 'u8[4096]{0}', space=vmem, size = 0x1000, scoped, tag = 'input window, operand 0']
    #allocation4 [shape = 's32[2]{0}', space=sflag, size = 0x8, scoped, tag = 'scoped memory for tpu_custom_call.1']
    #allocation5 [shape = 's32[2]{0}', space=sflag, size = 0x8, scoped, tag = 'scoped memory for tpu_custom_call.1']
    #allocation6 [shape = 'u8[65536]{0}', space=vmem, size = 0x10000, scoped, tag = 'input window, operand 2']
    #allocation7 [shape = 's32[2]{0}', space=sflag, size = 0x8, scoped, tag = 'scoped memory for tpu_custom_call.1']
    #allocation8 [shape = 'u8[65536]{0}', space=vmem, size = 0x10000, scoped, tag = 'input window, operand 3, single buffered']
    #allocation9 [shape = 'u8[65536]{0}', space=vmem, size = 0x10000, scoped, tag = 'input window, operand 5, single buffered']
    #allocation10 [shape = 's32[1]{0}', space=sflag, size = 0x4, scoped, tag = 'scoped memory for tpu_custom_call.1']
    #allocation11 [shape = 'u8[8192]{0}', space=vmem, size = 0x2000, scoped, tag = 'output window, operand 0']
    %12 = vsyncpa [#allocation4], 0
    %s13 = scalar_lea.sflag [#allocation4], 1
    %14 = vsyncpa %s13, 0
    %15 = vsyncpa [#allocation7], 0
    %s16 = scalar_lea.sflag [#allocation7], 1
    %17 = vsyncpa %s16, 0
    %18 = vsyncpa [#allocation10], 0
    %19 = vsyncpa [#allocation5], 0
    %s20 = scalar_lea.sflag [#allocation5], 1
    %21 = vsyncpa %s20, 0
    loop: start=0, step=1, limit=11
    $region2: #{tpu_custom_call.1} parent=1 // loop_pre_header
      _
    $region3: #{tpu_custom_call.1} parent=1 // loop_header
      %s23 = sphi 0, %s27
      %p24 = scmp.ge.s32.totalorder %s23, 11
      %s30 = sphi 0, %s42
      %s31 = sphi 0, %s38
      %s32 = sphi 0, %s30
      %s33 = sphi 0, %s31
      %s34 = sphi 0, %s32
      %s35 = sphi 0, %s33
      %s47 = sphi 0, %s49
      %s50 = sphi 0, %s47
      %s51 = sphi 0, %s50
      %s67 = sphi 0, %s51
      %s73 = sphi 0, %s75
      %s76 = sphi 0, %s73
      %s77 = sphi 0, %s76
      %s93 = sphi 0, %s77
      %s99 = sphi 0, %s101
      %s102 = sphi 0, %s99
      %s103 = sphi 0, %s102
      %s119 = sphi 0, %s103
      %s123 = sphi 0, %s123
      %s125 = sphi 0, %s123
      %s126 = sphi 0, %s125
      %s140 = sphi 0, %s126
      %s144 = sphi 0, %s144
      %s146 = sphi 0, %s144
      %s147 = sphi 0, %s146
      %s161 = sphi 0, %s147
      %s165 = sphi 0, %s165
      %s167 = sphi 0, %s165
      %s168 = sphi 0, %s167
      %s182 = sphi 0, %s168
      %s186 = sphi 0, %s186
      %s188 = sphi 0, %s186
      %s189 = sphi 0, %s188
      %s203 = sphi 0, %s189
      %s209 = sphi 0, %s211
      %s212 = sphi 0, %s209
      %s213 = sphi 0, %s212
      %s229 = sphi 0, %s213
    $region4: #{tpu_custom_call.1} parent=1 // loop_header_branch
      %26 = sbr.rel (%p24) target = $region8
    $region5: #{tpu_custom_call.1} parent=1 // loop_body
      %s28 = ssub.s32 %s23, 1
      %s29 = ssub.s32 %s23, 2
      %s36 = sadd.s32 1, %s31
      %p37 = scmp.ge.s32.totalorder %s36, 3
      %s38 = scalar_select %p37, 0, %s36
      %s39 = sadd.s32 1, %s30
      %s40 = scalar_select %p37, %s39, %s30
      %p41 = scmp.ge.s32.totalorder %s40, 3
      %s42 = scalar_select %p41, 0, %s40
      %s43 = ssub.s32 %s30, %s42
      %s44 = ssub.s32 %s31, %s38
      %s45 = sor.u32 %s43, %s44
      %p46 = scmp.eq.s32.totalorder %s45, 0
      %s48 = sadd.s32 %s47, 1
      %s49 = scalar_select %p46, %s47, %s48
      %p52 = pneg %p46
      %p53 = scmp.eq.s32.totalorder %s23, 8
      %p54 = por %p52, %p53
      %p55 = scmp.ne.s32.totalorder %s47, %s50
      %p56 = scmp.eq.s32.totalorder %s23, 0
      %p57 = por %p55, %p56
      %p58 = scmp.ne.s32.totalorder %s47, %s50
      %p59 = scmp.eq.s32.totalorder %s28, 8
      %p60 = por %p58, %p59
      %p61 = scmp.ne.s32.totalorder %s50, %s51
      %p62 = scmp.eq.s32.totalorder %s28, 0
      %p63 = por %p61, %p62
      %p64 = scmp.ne.s32.totalorder %s50, %s51
      %p65 = scmp.eq.s32.totalorder %s29, 8
      %p66 = por %p64, %p65
      %p68 = scmp.ne.s32.totalorder %s51, %s67
      %p69 = scmp.eq.s32.totalorder %s29, 0
      %p70 = por %p68, %p69
      %s71 = ssub.s32 %s30, %s42
      %p72 = scmp.eq.s32.totalorder %s71, 0
      %s74 = sadd.s32 %s73, 1
      %s75 = scalar_select %p72, %s73, %s74
      %p78 = pneg %p72
      %p79 = scmp.eq.s32.totalorder %s23, 8
      %p80 = por %p78, %p79
      %p81 = scmp.ne.s32.totalorder %s73, %s76
      %p82 = scmp.eq.s32.totalorder %s23, 0
      %p83 = por %p81, %p82
      %p84 = scmp.ne.s32.totalorder %s73, %s76
      %p85 = scmp.eq.s32.totalorder %s28, 8
      %p86 = por %p84, %p85
      %p87 = scmp.ne.s32.totalorder %s76, %s77
      %p88 = scmp.eq.s32.totalorder %s28, 0
      %p89 = por %p87, %p88
      %p90 = scmp.ne.s32.totalorder %s76, %s77
      %p91 = scmp.eq.s32.totalorder %s29, 8
      %p92 = por %p90, %p91
      %p94 = scmp.ne.s32.totalorder %s77, %s93
      %p95 = scmp.eq.s32.totalorder %s29, 0
      %p96 = por %p94, %p95
      %s97 = ssub.s32 %s31, %s38
      %p98 = scmp.eq.s32.totalorder %s97, 0
      %s100 = sadd.s32 %s99, 1
      %s101 = scalar_select %p98, %s99, %s100
      %p104 = pneg %p98
      %p105 = scmp.eq.s32.totalorder %s23, 8
      %p106 = por %p104, %p105
      %p107 = scmp.ne.s32.totalorder %s99, %s102
      %p108 = scmp.eq.s32.totalorder %s23, 0
      %p109 = por %p107, %p108
      %p110 = scmp.ne.s32.totalorder %s99, %s102
      %p111 = scmp.eq.s32.totalorder %s28, 8
      %p112 = por %p110, %p111
      %p113 = scmp.ne.s32.totalorder %s102, %s103
      %p114 = scmp.eq.s32.totalorder %s28, 0
      %p115 = por %p113, %p114
      %p116 = scmp.ne.s32.totalorder %s102, %s103
      %p117 = scmp.eq.s32.totalorder %s29, 8
      %p118 = por %p116, %p117
      %p120 = scmp.ne.s32.totalorder %s103, %s119
      %p121 = scmp.eq.s32.totalorder %s29, 0
      %p122 = por %p120, %p121
      %s124 = sadd.s32 %s123, 1
      %p127 = scmp.eq.s32.totalorder %s23, 8
      %p128 = scmp.ne.s32.totalorder %s123, %s125
      %p129 = scmp.eq.s32.totalorder %s23, 0
      %p130 = por %p128, %p129
      %p131 = scmp.ne.s32.totalorder %s123, %s125
      %p132 = scmp.eq.s32.totalorder %s28, 8
      %p133 = por %p131, %p132
      %p134 = scmp.ne.s32.totalorder %s125, %s126
      %p135 = scmp.eq.s32.totalorder %s28, 0
      %p136 = por %p134, %p135
      %p137 = scmp.ne.s32.totalorder %s125, %s126
      %p138 = scmp.eq.s32.totalorder %s29, 8
      %p139 = por %p137, %p138
      %p141 = scmp.ne.s32.totalorder %s126, %s140
      %p142 = scmp.eq.s32.totalorder %s29, 0
      %p143 = por %p141, %p142
      %s145 = sadd.s32 %s144, 1
      %p148 = scmp.eq.s32.totalorder %s23, 8
      %p149 = scmp.ne.s32.totalorder %s144, %s146
      %p150 = scmp.eq.s32.totalorder %s23, 0
      %p151 = por %p149, %p150
      %p152 = scmp.ne.s32.totalorder %s144, %s146
      %p153 = scmp.eq.s32.totalorder %s28, 8
      %p154 = por %p152, %p153
      %p155 = scmp.ne.s32.totalorder %s146, %s147
      %p156 = scmp.eq.s32.totalorder %s28, 0
      %p157 = por %p155, %p156
      %p158 = scmp.ne.s32.totalorder %s146, %s147
      %p159 = scmp.eq.s32.totalorder %s29, 8
      %p160 = por %p158, %p159
      %p162 = scmp.ne.s32.totalorder %s147, %s161
      %p163 = scmp.eq.s32.totalorder %s29, 0
      %p164 = por %p162, %p163
      %s166 = sadd.s32 %s165, 1
      %p169 = scmp.eq.s32.totalorder %s23, 8
      %p170 = scmp.ne.s32.totalorder %s165, %s167
      %p171 = scmp.eq.s32.totalorder %s23, 0
      %p172 = por %p170, %p171
      %p173 = scmp.ne.s32.totalorder %s165, %s167
      %p174 = scmp.eq.s32.totalorder %s28, 8
      %p175 = por %p173, %p174
      %p176 = scmp.ne.s32.totalorder %s167, %s168
      %p177 = scmp.eq.s32.totalorder %s28, 0
      %p178 = por %p176, %p177
      %p179 = scmp.ne.s32.totalorder %s167, %s168
      %p180 = scmp.eq.s32.totalorder %s29, 8
      %p181 = por %p179, %p180
      %p183 = scmp.ne.s32.totalorder %s168, %s182
      %p184 = scmp.eq.s32.totalorder %s29, 0
      %p185 = por %p183, %p184
      %s187 = sadd.s32 %s186, 1
      %p190 = scmp.eq.s32.totalorder %s23, 8
      %p191 = scmp.ne.s32.totalorder %s186, %s188
      %p192 = scmp.eq.s32.totalorder %s23, 0
      %p193 = por %p191, %p192
      %p194 = scmp.ne.s32.totalorder %s186, %s188
      %p195 = scmp.eq.s32.totalorder %s28, 8
      %p196 = por %p194, %p195
      %p197 = scmp.ne.s32.totalorder %s188, %s189
      %p198 = scmp.eq.s32.totalorder %s28, 0
      %p199 = por %p197, %p198
      %p200 = scmp.ne.s32.totalorder %s188, %s189
      %p201 = scmp.eq.s32.totalorder %s29, 8
      %p202 = por %p200, %p201
      %p204 = scmp.ne.s32.totalorder %s189, %s203
      %p205 = scmp.eq.s32.totalorder %s29, 0
      %p206 = por %p204, %p205
      %s207 = ssub.s32 %s30, %s42
      %p208 = scmp.eq.s32.totalorder %s207, 0
      %s210 = sadd.s32 %s209, 1
      %s211 = scalar_select %p208, %s209, %s210
      %p214 = pneg %p208
      %p215 = scmp.eq.s32.totalorder %s23, 8
      %p216 = por %p214, %p215
      %p217 = scmp.ne.s32.totalorder %s209, %s212
      %p218 = scmp.eq.s32.totalorder %s23, 0
      %p219 = por %p217, %p218
      %p220 = scmp.ne.s32.totalorder %s209, %s212
      %p221 = scmp.eq.s32.totalorder %s28, 8
      %p222 = por %p220, %p221
      %p223 = scmp.ne.s32.totalorder %s212, %s213
      %p224 = scmp.eq.s32.totalorder %s28, 0
      %p225 = por %p223, %p224
      %p226 = scmp.ne.s32.totalorder %s212, %s213
      %p227 = scmp.eq.s32.totalorder %s29, 8
      %p228 = por %p226, %p227
      %p230 = scmp.ne.s32.totalorder %s213, %s229
      %p231 = scmp.eq.s32.totalorder %s29, 0
      %p232 = por %p230, %p231
      %p233 = scmp.le.s32.totalorder 1, %s23
      %p234 = scmp.lt.s32.totalorder %s23, 10
      %p235 = pnand %p233, %p234
      %p236 = pneg %p235
      // Predicated region
      $region9: #{tpu_custom_call.1} parent=5 // pred_check
        _
      $region10: #{tpu_custom_call.1} parent=5 // pred_check_branch
        %238 = sbr.rel (%p235) target = $region12
      $region11: #{tpu_custom_call.1} parent=5 // pred_region
        %s239 = ssub.s32 %s23, 1
        // Predicated region
        $region13: #{tpu_custom_call.1} parent=11 // pred_check
          %p240 = pneg %p136
        $region14: #{tpu_custom_call.1} parent=11 // pred_check_branch
          %242 = sbr.rel (%p240) target = $region16
        $region15: #{tpu_custom_call.1} parent=11 // pred_region
          %244 = vsyncadd [#allocation7], 0
          %s245 = sshll.u32 %s3, 4
          %s246 = int_to_ptr.hbm [resolvable:$true] %s245
          %s247 = sshll.u32 [#allocation8], 4
          %s248 = int_to_ptr.vmem [resolvable:$true] %s247
          %253 = dma.hbm_to_vmem [thread:$0]  %s246, 2048, %s248, [#allocation7], 128, 128, 8
        $region16: #{tpu_custom_call.1} parent=11 // pred_fallthru
          _
        // Predicated region
        $region17: #{tpu_custom_call.1} parent=11 // pred_check
          %p254 = pneg %p157
        $region18: #{tpu_custom_call.1} parent=11 // pred_check_branch
          %256 = sbr.rel (%p254) target = $region20
        $region19: #{tpu_custom_call.1} parent=11 // pred_region
          _
        $region20: #{tpu_custom_call.1} parent=11 // pred_fallthru
          _
        // Predicated region
        $region21: #{tpu_custom_call.1} parent=11 // pred_check
          %p257 = pneg %p178
        $region22: #{tpu_custom_call.1} parent=11 // pred_check_branch
          %259 = sbr.rel (%p257) target = $region24
        $region23: #{tpu_custom_call.1} parent=11 // pred_region
          %261 = vsyncadd [#allocation10], 0
          %s262 = sshll.u32 %s5, 4
          %s263 = int_to_ptr.hbm [resolvable:$true] %s262
          %s264 = sshll.u32 [#allocation9], 4
          %s265 = int_to_ptr.vmem [resolvable:$true] %s264
          %270 = dma.hbm_to_vmem [thread:$0]  %s263, 2048, %s265, [#allocation10], 128, 128, 8
        $region24: #{tpu_custom_call.1} parent=11 // pred_fallthru
          _
        // Predicated region
        $region25: #{tpu_custom_call.1} parent=11 // pred_check
          %p271 = pneg %p199
        $region26: #{tpu_custom_call.1} parent=11 // pred_check_branch
          %273 = sbr.rel (%p271) target = $region28
        $region27: #{tpu_custom_call.1} parent=11 // pred_region
          _
        $region28: #{tpu_custom_call.1} parent=11 // pred_fallthru
          _
      $region12: #{tpu_custom_call.1} parent=5 // pred_fallthru
        _
      %p274 = scmp.lt.s32.totalorder %s23, 9
      // Predicated region
      $region29: #{tpu_custom_call.1} parent=5 // pred_check
        %p275 = pneg %p274
      $region30: #{tpu_custom_call.1} parent=5 // pred_check_branch
        %277 = sbr.rel (%p275) target = $region32
      $region31: #{tpu_custom_call.1} parent=5 // pred_region
        // Predicated region
        $region33: #{tpu_custom_call.1} parent=31 // pred_check
          %p278 = pneg %p57
        $region34: #{tpu_custom_call.1} parent=31 // pred_check_branch
          %280 = sbr.rel (%p278) target = $region36
        $region35: #{tpu_custom_call.1} parent=31 // pred_region
          %s281 = sand.u32 %s47, 1
          %s282 = scalar_lea.sflag [#allocation4], %s281
          %s283 = sand.u32 %s47, 1
          %s284 = smul.addr %s283, 4
          %s285 = scalar_lea.vmem [#allocation3], %s284
          %287 = vsyncadd %s282, 0
          %s288 = smul.addr %s30, 3
          %s289 = sadd.s32 %s31, %s288
          %s290 = smul.addr %s289, 4
          %s291 = scalar_lea.hbm %s0, %s290
          %s293 = sshll.u32 %s291, 4
          %s294 = int_to_ptr.hbm [resolvable:$true] %s293
          %s295 = sshll.u32 %s285, 4
          %s296 = int_to_ptr.vmem [resolvable:$true] %s295
          %298 = dma.hbm_to_vmem [thread:$0]  %s294, 64, %s296, %s282
        $region36: #{tpu_custom_call.1} parent=31 // pred_fallthru
          _
        // Predicated region
        $region37: #{tpu_custom_call.1} parent=31 // pred_check
          %p299 = pneg %p83
        $region38: #{tpu_custom_call.1} parent=31 // pred_check_branch
          %301 = sbr.rel (%p299) target = $region40
        $region39: #{tpu_custom_call.1} parent=31 // pred_region
          %p302 = scmp.lt.s32.totalorder %s30, 2
          %s303 = scalar_select %p302, %s30, 2
          %s304 = smul.addr %s303, 8
          %s305 = scalar_lea.vmem %s1, %s304
        $region40: #{tpu_custom_call.1} parent=31 // pred_fallthru
          _
        // Predicated region
        $region41: #{tpu_custom_call.1} parent=31 // pred_check
          %p306 = pneg %p109
        $region42: #{tpu_custom_call.1} parent=31 // pred_check_branch
          %308 = sbr.rel (%p306) target = $region44
        $region43: #{tpu_custom_call.1} parent=31 // pred_region
          %s309 = sand.u32 %s23, 1
          %s310 = scalar_lea.sflag [#allocation7], %s309
          %s311 = sand.u32 %s99, 1
          %s312 = smul.addr %s311, 64
          %s313 = scalar_lea.vmem [#allocation6], %s312
          %s314 = smul.u32 16, %s31
          %316 = vsyncadd %s310, 0
          %s317 = smul.addr %s314, 4
          %s318 = scalar_lea.hbm %s2, %s317
          %s319 = sshll.u32 %s318, 4
          %s320 = int_to_ptr.hbm [resolvable:$true] %s319
          %s321 = sshll.u32 %s313, 4
          %s322 = int_to_ptr.vmem [resolvable:$true] %s321
          %327 = dma.hbm_to_vmem [thread:$0]  %s320, 1024, %s322, %s310, 64, 64, 4
        $region44: #{tpu_custom_call.1} parent=31 // pred_fallthru
          _
      $region32: #{tpu_custom_call.1} parent=5 // pred_fallthru
        _
      %p328 = scmp.le.s32.totalorder 1, %s23
      %p329 = scmp.lt.s32.totalorder %s23, 10
      %p330 = pnand %p328, %p329
      %p331 = pneg %p330
      // Predicated region
      $region45: #{tpu_custom_call.1} parent=5 // pred_check
        _
      $region46: #{tpu_custom_call.1} parent=5 // pred_check_branch
        %333 = sbr.rel (%p330) target = $region48
      $region47: #{tpu_custom_call.1} parent=5 // pred_region
        %s334 = ssub.s32 %s23, 1
        %s335 = sand.u32 %s50, 1
        %s336 = scalar_lea.sflag [#allocation4], %s335
        %s337 = sand.u32 %s50, 1
        %s338 = smul.addr %s337, 4
        %s339 = scalar_lea.vmem [#allocation3], %s338
        // Predicated region
        $region49: #{tpu_custom_call.1} parent=47 // pred_check
          %p340 = pneg %p63
        $region50: #{tpu_custom_call.1} parent=47 // pred_check_branch
          %342 = sbr.rel (%p340) target = $region52
        $region51: #{tpu_custom_call.1} parent=47 // pred_region
          %344 = dma.done %s336, 64
        $region52: #{tpu_custom_call.1} parent=47 // pred_fallthru
          _
        %s345 = sand.u32 %s28, 1
        %s346 = scalar_lea.sflag [#allocation7], %s345
        %s347 = sand.u32 %s102, 1
        %s348 = smul.addr %s347, 64
        %s349 = scalar_lea.vmem [#allocation6], %s348
        // Predicated region
        $region53: #{tpu_custom_call.1} parent=47 // pred_check
          %p350 = pneg %p115
        $region54: #{tpu_custom_call.1} parent=47 // pred_check_branch
          %352 = sbr.rel (%p350) target = $region56
        $region55: #{tpu_custom_call.1} parent=47 // pred_region
          %354 = dma.done %s346, 1024
        $region56: #{tpu_custom_call.1} parent=47 // pred_fallthru
          _
        // Predicated region
        $region57: #{tpu_custom_call.1} parent=47 // pred_check
          %p355 = pneg %p136
        $region58: #{tpu_custom_call.1} parent=47 // pred_check_branch
          %357 = sbr.rel (%p355) target = $region60
        $region59: #{tpu_custom_call.1} parent=47 // pred_region
          %359 = dma.done [#allocation7], 2048
        $region60: #{tpu_custom_call.1} parent=47 // pred_fallthru
          _
        // Predicated region
        $region61: #{tpu_custom_call.1} parent=47 // pred_check
          %p360 = pneg %p178
        $region62: #{tpu_custom_call.1} parent=47 // pred_check_branch
          %362 = sbr.rel (%p360) target = $region64
        $region63: #{tpu_custom_call.1} parent=47 // pred_region
          %364 = dma.done [#allocation10], 2048
        $region64: #{tpu_custom_call.1} parent=47 // pred_fallthru
          _
        %s365 = sand.u32 %s50, 1
        %s366 = scalar_lea.sflag [#allocation4], %s365
        %s367 = sand.u32 %s50, 1
        %s368 = smul.addr %s367, 4
        %s369 = scalar_lea.vmem [#allocation3], %s368
        %p370 = pneg %p63
        %p371 = pneg %p60
        %p372 = scmp.lt.s32.totalorder %s32, 2
        %s373 = scalar_select %p372, %s32, 2
        %s374 = smul.addr %s373, 8
        %s375 = scalar_lea.vmem %s1, %s374
        %p376 = pneg %p89
        %p377 = pneg %p86
        %s378 = sand.u32 %s28, 1
        %s379 = scalar_lea.sflag [#allocation7], %s378
        %s380 = sand.u32 %s102, 1
        %s381 = smul.addr %s380, 64
        %s382 = scalar_lea.vmem [#allocation6], %s381
        %p383 = pneg %p115
        %p384 = pneg %p112
        %p385 = pneg %p136
        %p386 = pneg %p133
        %p387 = pneg %p157
        %p388 = pneg %p154
        %p389 = pneg %p178
        %p390 = pneg %p175
        %p391 = pneg %p199
        %p392 = pneg %p196
        %p393 = pneg %p225
        %p394 = pneg %p222
        %s395 = sand.u32 %s212, 1
        %s396 = scalar_lea.sflag [#allocation5], %s395
        %s397 = sand.u32 %s212, 1
        %s398 = smul.addr %s397, 8
        %s399 = scalar_lea.vmem [#allocation11], %s398
        %p400 = scmp.lt.s32.totalorder %s32, 2
        %s401 = scalar_select %p400, %s32, 2
        %s402 = smul.addr %s401, 8
        %s403 = scalar_lea.vmem %s1, %s402
        %s404 = smul.u32 16, %s33
        %p405 = scmp.eq.s32.totalorder %s33, 0
        // Predicated region
        $region65: #{tpu_custom_call.1} parent=47 // pred_check
          %p406 = pneg %p405
        $region66: #{tpu_custom_call.1} parent=47 // pred_check_branch
          %408 = sbr.rel (%p406) target = $region68
        $region67: #{tpu_custom_call.1} parent=47 // pred_region
          %409 = vst [vmem:[#allocation2] sm:$0xff] 0.0
        $region68: #{tpu_custom_call.1} parent=47 // pred_fallthru
          _
        %v410 = vld [vmem:[#allocation2] sm:$0xff]
        %v411 = vld [vmem:[%s339] sm:$0xf]
        %v412 = vld [vmem:[%s349] sm:$0xf]
        %v413 = vld [vmem:[%s349 + $0x4] sm:$0xf]
        %v414 = vld [vmem:[%s349 + $0x8] sm:$0xf]
        %v415 = vld [vmem:[%s349 + $0xc] sm:$0xf]
        %v416 = vld [vmem:[%s349 + $0x10] sm:$0xf]
        %v417 = vld [vmem:[%s349 + $0x14] sm:$0xf]
        %v418 = vld [vmem:[%s349 + $0x18] sm:$0xf]
        %v419 = vld [vmem:[%s349 + $0x1c] sm:$0xf]
        %v420 = vld [vmem:[%s349 + $0x20] sm:$0xf]
        %v421 = vld [vmem:[%s349 + $0x24] sm:$0xf]
        %v422 = vld [vmem:[%s349 + $0x28] sm:$0xf]
        %v423 = vld [vmem:[%s349 + $0x2c] sm:$0xf]
        %v424 = vld [vmem:[%s349 + $0x30] sm:$0xf]
        %v425 = vld [vmem:[%s349 + $0x34] sm:$0xf]
        %v426 = vld [vmem:[%s349 + $0x38] sm:$0xf]
        %v427 = vld [vmem:[%s349 + $0x3c] sm:$0xf]
        %v444 = vunpack.c.l.b16 %v412
        %v445 = vunpack.c.l.b16 %v413
        %v446 = vunpack.c.l.b16 %v414
        %v447 = vunpack.c.l.b16 %v415
        %v448 = vunpack.c.l.b16 %v416
        %v449 = vunpack.c.l.b16 %v417
        %v450 = vunpack.c.l.b16 %v418
        %v451 = vunpack.c.l.b16 %v419
        %v452 = vunpack.c.l.b16 %v420
        %v453 = vunpack.c.l.b16 %v421
        %v454 = vunpack.c.l.b16 %v422
        %v455 = vunpack.c.l.b16 %v423
        %v456 = vunpack.c.l.b16 %v424
        %v457 = vunpack.c.l.b16 %v425
        %v458 = vunpack.c.l.b16 %v426
        %v459 = vunpack.c.l.b16 %v427
        %v460 = vpack.c.b16 %v445, %v444
        %v461 = vpack.c.b16 %v447, %v446
        %v462 = vpack.c.b16 %v449, %v448
        %v463 = vpack.c.b16 %v451, %v450
        %v464 = vpack.c.b16 %v453, %v452
        %v465 = vpack.c.b16 %v455, %v454
        %v466 = vpack.c.b16 %v457, %v456
        %v467 = vpack.c.b16 %v459, %v458
        %476 = vmatpush.bf16.msra.mxu0 %v467
        %477 = vmatpush.bf16.msra.mxu0 %v466
        %478 = vmatpush.bf16.msra.mxu0 %v465
        %479 = vmatpush.bf16.msra.mxu0 %v464
        %480 = vmatpush.bf16.msra.mxu0 %v463
        %481 = vmatpush.bf16.msra.mxu0 %v462
        %482 = vmatpush.bf16.msra.mxu0 %v461
        %483 = vmatpush.bf16.msra.mxu0 %v460
        %484 = vmatmul.bf16.gmra.mxu0 %v411
        %v485 = vpop.f32.mrf.mxu0
        %v486 = vadd.f32 0.0, %v485
        %v487 = vpop.f32.mrf.mxu0
        %488 = vdwg.mxu0
        %v489 = vadd.f32 %v410, %v486
        %490 = vst [vmem:[#allocation2] sm:$0xff] %v489
        %p491 = scmp.eq.s32.totalorder %s33, 2
        // Predicated region
        $region69: #{tpu_custom_call.1} parent=47 // pred_check
          %p492 = pneg %p491
        $region70: #{tpu_custom_call.1} parent=47 // pred_check_branch
          %494 = sbr.rel (%p492) target = $region72
        $region71: #{tpu_custom_call.1} parent=47 // pred_region
          %v495 = vld [vmem:[#allocation2] sm:$0xff]
          %v496 = vld [vmem:[%s403] sm:$0xff]
          %498 = vset.pattern.permute.xlu0 0
          %499 = vperm.xlu0 %498, %v496
          %v500 = vpop.permute.xlu0 %499
          %v502 = vmul.f32 %v495, %v500
          %v503 = vld [vmem:[#allocation8] sm:$0xff]
          %v504 = vld [vmem:[#allocation8 + $0x8] sm:$0xff]
          %v505 = vld [vmem:[#allocation8 + $0x10] sm:$0xff]
          %v506 = vld [vmem:[#allocation8 + $0x18] sm:$0xff]
          %v507 = vld [vmem:[#allocation8 + $0x20] sm:$0xff]
          %v508 = vld [vmem:[#allocation8 + $0x28] sm:$0xff]
          %v509 = vld [vmem:[#allocation8 + $0x30] sm:$0xff]
          %v510 = vld [vmem:[#allocation8 + $0x38] sm:$0xff]
          %v511 = vld [vmem:[#allocation8 + $0x40] sm:$0xff]
          %v512 = vld [vmem:[#allocation8 + $0x48] sm:$0xff]
          %v513 = vld [vmem:[#allocation8 + $0x50] sm:$0xff]
          %v514 = vld [vmem:[#allocation8 + $0x58] sm:$0xff]
          %v515 = vld [vmem:[#allocation8 + $0x60] sm:$0xff]
          %v516 = vld [vmem:[#allocation8 + $0x68] sm:$0xff]
          %v517 = vld [vmem:[#allocation8 + $0x70] sm:$0xff]
          %v518 = vld [vmem:[#allocation8 + $0x78] sm:$0xff]
          %v519 = vld [vmem:[%s4] sm:$0x1]
          %v521 = vperm.slane %v519, 0
          %523 = vmatpush.msra.mxu0 %v518
          %524 = vmatpush.msra.mxu0 %v517
          %525 = vmatpush.msra.mxu0 %v516
          %526 = vmatpush.msra.mxu0 %v515
          %527 = vmatpush.msra.mxu0 %v514
          %528 = vmatpush.msra.mxu0 %v513
          %529 = vmatpush.msra.mxu0 %v512
          %530 = vmatpush.msra.mxu0 %v511
          %531 = vmatpush.msra.mxu0 %v510
          %532 = vmatpush.msra.mxu0 %v509
          %533 = vmatpush.msra.mxu0 %v508
          %534 = vmatpush.msra.mxu0 %v507
          %535 = vmatpush.msra.mxu0 %v506
          %536 = vmatpush.msra.mxu0 %v505
          %537 = vmatpush.msra.mxu0 %v504
          %538 = vmatpush.msra.mxu0 %v503
          %539 = vmatmul.f32.gmra.mxu0 %v502
          %v540 = vpop.f32.mrf.mxu0
          %v541 = vadd.f32 %v521, %v540
          %542 = vdwg.mxu0
          %v543 = vmax.f32 %v541, 0.0
          %v544 = vld [vmem:[#allocation9] sm:$0xff]
          %v545 = vld [vmem:[#allocation9 + $0x8] sm:$0xff]
          %v546 = vld [vmem:[#allocation9 + $0x10] sm:$0xff]
          %v547 = vld [vmem:[#allocation9 + $0x18] sm:$0xff]
          %v548 = vld [vmem:[#allocation9 + $0x20] sm:$0xff]
          %v549 = vld [vmem:[#allocation9 + $0x28] sm:$0xff]
          %v550 = vld [vmem:[#allocation9 + $0x30] sm:$0xff]
          %v551 = vld [vmem:[#allocation9 + $0x38] sm:$0xff]
          %v552 = vld [vmem:[#allocation9 + $0x40] sm:$0xff]
          %v553 = vld [vmem:[#allocation9 + $0x48] sm:$0xff]
          %v554 = vld [vmem:[#allocation9 + $0x50] sm:$0xff]
          %v555 = vld [vmem:[#allocation9 + $0x58] sm:$0xff]
          %v556 = vld [vmem:[#allocation9 + $0x60] sm:$0xff]
          %v557 = vld [vmem:[#allocation9 + $0x68] sm:$0xff]
          %v558 = vld [vmem:[#allocation9 + $0x70] sm:$0xff]
          %v559 = vld [vmem:[#allocation9 + $0x78] sm:$0xff]
          %v560 = vld [vmem:[%s6] sm:$0x1]
          %v562 = vperm.slane %v560, 0
          %564 = vmatpush.msra.mxu0 %v559
          %565 = vmatpush.msra.mxu0 %v558
          %566 = vmatpush.msra.mxu0 %v557
          %567 = vmatpush.msra.mxu0 %v556
          %568 = vmatpush.msra.mxu0 %v555
          %569 = vmatpush.msra.mxu0 %v554
          %570 = vmatpush.msra.mxu0 %v553
          %571 = vmatpush.msra.mxu0 %v552
          %572 = vmatpush.msra.mxu0 %v551
          %573 = vmatpush.msra.mxu0 %v550
          %574 = vmatpush.msra.mxu0 %v549
          %575 = vmatpush.msra.mxu0 %v548
          %576 = vmatpush.msra.mxu0 %v547
          %577 = vmatpush.msra.mxu0 %v546
          %578 = vmatpush.msra.mxu0 %v545
          %579 = vmatpush.msra.mxu0 %v544
          %580 = vmatmul.f32.gmra.mxu0 %v543
          %v581 = vpop.f32.mrf.mxu0
          %v582 = vadd.f32 %v562, %v581
          %583 = vdwg.mxu0
          %584 = vmax.xlane.f32.xlu0 %v582
          %v585 = vpop.xlane.xlu0 %584
          %v586 = vsub.f32 %v582, %v585
          %v587 = vmul.f32 %v586, 1.442695
          %v588 = vpow.pop %v587
          %589 = vadd.xlane.f32.xlu0 %v588
          %v590 = vpop.xlane.xlu0 %589
          %v591 = vlog2.pop %v590
          %v592 = vmul.f32 %v591, 0.6931472
          %v593 = vsub.f32 %v586, %v592
          %594 = vst [vmem:[%s399] sm:$0xff] %v593
        $region72: #{tpu_custom_call.1} parent=47 // pred_fallthru
          _
        %s595 = sand.u32 %s212, 1
        %s596 = scalar_lea.sflag [#allocation5], %s595
        %s597 = sand.u32 %s212, 1
        %s598 = smul.addr %s597, 8
        %s599 = scalar_lea.vmem [#allocation11], %s598
        // Predicated region
        $region73: #{tpu_custom_call.1} parent=47 // pred_check
          %p600 = pneg %p222
        $region74: #{tpu_custom_call.1} parent=47 // pred_check_branch
          %602 = sbr.rel (%p600) target = $region76
        $region75: #{tpu_custom_call.1} parent=47 // pred_region
          %604 = vsyncadd %s596, 0
          %s605 = smul.addr %s32, 8
          %s606 = scalar_lea.hbm %s7, %s605
          %s608 = sshll.u32 %s599, 4
          %s609 = int_to_ptr.vmem [resolvable:$true] %s608
          %s610 = sshll.u32 %s606, 4
          %s611 = int_to_ptr.hbm [resolvable:$true] %s610
          %613 = dma.vmem_to_hbm [thread:$0]  %s609, 128, %s611, %s596
        $region76: #{tpu_custom_call.1} parent=47 // pred_fallthru
          _
      $region48: #{tpu_custom_call.1} parent=5 // pred_fallthru
        _
      %p614 = scmp.le.s32.totalorder 2, %s23
      // Predicated region
      $region77: #{tpu_custom_call.1} parent=5 // pred_check
        %p615 = pneg %p614
      $region78: #{tpu_custom_call.1} parent=5 // pred_check_branch
        %617 = sbr.rel (%p615) target = $region80
      $region79: #{tpu_custom_call.1} parent=5 // pred_region
        %s618 = ssub.s32 %s23, 2
        // Predicated region
        $region81: #{tpu_custom_call.1} parent=79 // pred_check
          %p619 = pneg %p228
        $region82: #{tpu_custom_call.1} parent=79 // pred_check_branch
          %621 = sbr.rel (%p619) target = $region84
        $region83: #{tpu_custom_call.1} parent=79 // pred_region
          %s622 = sand.u32 %s213, 1
          %s623 = scalar_lea.sflag [#allocation5], %s622
          %s624 = sand.u32 %s213, 1
          %s625 = smul.addr %s624, 8
          %s626 = scalar_lea.vmem [#allocation11], %s625
          %628 = dma.done %s623, 128
        $region84: #{tpu_custom_call.1} parent=79 // pred_fallthru
          _
      $region80: #{tpu_custom_call.1} parent=5 // pred_fallthru
        _
    $region6: #{tpu_custom_call.1} parent=1 // loop_footer
      %s27 = sadd.s32 1, %s23
    $region7: #{tpu_custom_call.1} parent=1 // loop_footer_branch
      %22 = sbr.rel target = $region3
    $region8: #{tpu_custom_call.1} parent=1 // loop_exit
      _
    %629 = vsyncpa [#allocation4], 1
    %s630 = scalar_lea.sflag [#allocation4], 1
    %631 = vsyncpa %s630, 1
    %632 = vsyncpa [#allocation7], 1
    %s633 = scalar_lea.sflag [#allocation7], 1
    %634 = vsyncpa %s633, 1
    %635 = vsyncpa [#allocation10], 1
    %636 = vsyncpa [#allocation5], 1
    %s637 = scalar_lea.sflag [#allocation5], 1
    %638 = vsyncpa %s637, 1

</llo_original>
